<compile_context>
chip_gen: v5e
topology: v5e:2x2
jax: 0.10.0
libtpu: 0.0.40
codegen_flags: <defaults>
</compile_context>

<pallas_src>
import jax
import jax.numpy as jnp
from jax.experimental import pallas as pl
from jax.experimental.pallas import tpu as pltpu

SUBLANE = 8      # f32 sublane granule (rows)
TM_MAX = 2048    # max batch-tile rows per grid step


def _round_up(n, m):
    return -(-n // m) * m


def _fused_linear_kernel(x_ref, w_ref, b_ref, o_ref):
    # x_ref: (tm, in_f)   f32   batch tile
    # w_ref: (in_f, out_f) f32  fused w1 @ w2, VMEM-resident across the grid
    # b_ref: (1, out_f)   f32   fused bias, VMEM-resident across the grid
    # o_ref: (tm, out_f)  f32
    y = jnp.dot(x_ref[...], w_ref[...], preferred_element_type=jnp.float32)
    o_ref[...] = (y + b_ref[...]).astype(o_ref.dtype)


def fuse_params(w1, b1, w2, b2):
    """One-time parameter prep (call OUTSIDE the hot path).

    Two bias-carrying linears with no nonlinearity fuse algebraically:
        (x @ w1 + b1) @ w2 + b2 == x @ (w1 @ w2) + (b1 @ w2 + b2)
    Note: not bit-identical to the sequential reference (different rounding),
    but well within 1e-5 for 10-dim f32.
    """
    w = w1 @ w2                              # (in_f, out_f)
    b = (b1 @ w2 + b2).reshape(1, -1)        # (1, out_f)
    return w.astype(jnp.float32), b.astype(jnp.float32)


def simple_module_forward(x, w_fused, b_fused):
    """x: (B, 10) f32; w_fused: (10, 10); b_fused: (1, 10)."""
    B, in_f = x.shape
    in_f_w, out_f = w_fused.shape
    assert in_f == in_f_w

    # Round batch only to the sublane granule (8 rows), never to tm.
    b_rounded = _round_up(B, SUBLANE)

    # Batch tile: as big as possible to amortize ~0.35 us/step fixed cost,
    # but aim for >= 2 grid steps on larger batches so v7x's two TensorCores
    # both get work under dimension_semantics=("parallel",).
    tm = min(b_rounded, TM_MAX)
    if b_rounded > 2 * SUBLANE:
        tm = min(tm, _round_up(pl.cdiv(b_rounded, 2), SUBLANE))
    num_tiles = pl.cdiv(b_rounded, tm)

    x_in = x
    if b_rounded != B:
        x_in = jnp.zeros((b_rounded, in_f), x.dtype).at[:B, :].set(x)

    out = pl.pallas_call(
        _fused_linear_kernel,
        out_shape=jax.ShapeDtypeStruct((b_rounded, out_f), x.dtype),
        grid=(num_tiles,),
        in_specs=[
            # x tile over batch; last dim == full array dim -> (8,128) rule ok,
            # Mosaic pads the 10-wide lane dim in-vreg.
            pl.BlockSpec((tm, in_f), lambda i: (i, 0)),
            # fused weight / bias stay VMEM-resident across all grid steps.
            pl.BlockSpec((in_f_w, out_f), lambda i: (0, 0)),
            pl.BlockSpec((1, out_f), lambda i: (0, 0)),
        ],
        out_specs=pl.BlockSpec((tm, out_f), lambda i: (i, 0)),
        compiler_params=pltpu.CompilerParams(
            dimension_semantics=("parallel",),  # batch tiles are independent
        ),
    )(x_in, w_fused, b_fused)

    if b_rounded != B:
        out = out[:B]
    return out


def _init_linear_params(key, in_features, out_features):
    # Mimics PyTorch nn.Linear default init bounds, deterministically.
    kw, kb = jax.random.split(key)
    bound = 1.0 / jnp.sqrt(in_features)
    # Stored as (in, out) = transpose of PyTorch's (out, in).
    w = jax.random.uniform(kw, (in_features, out_features),
                           minval=-bound, maxval=bound, dtype=jnp.float32)
    b = jax.random.uniform(kb, (out_features,),
                           minval=-bound, maxval=bound, dtype=jnp.float32)
    return w, b


def reference_forward(x, w1, b1, w2, b2):
    h = x @ w1 + b1
    return h @ w2 + b2


if __name__ == "__main__":
    key = jax.random.PRNGKey(0)
    k_x, k_l1, k_l2 = jax.random.split(key, 3)

    B, F = 8, 10  # batch=8, features=10 (matches nn.Linear(10, 10))
    x = jax.random.normal(k_x, (B, F), dtype=jnp.float32)

    w1, b1 = _init_linear_params(k_l1, F, F)
    w2, b2 = _init_linear_params(k_l2, F, F)

    # One-time parameter prep (hoisted out of the hot path).
    w_fused, b_fused = fuse_params(w1, b1, w2, b2)
    w_fused, b_fused = jax.block_until_ready((w_fused, b_fused))

    out = simple_module_forward(x, w_fused, b_fused)
    out = jax.block_until_ready(out)

    ref = reference_forward(x, w1, b1, w2, b2)
    assert out.shape == (B, F)
    assert jnp.allclose(out, ref, atol=1e-5, rtol=1e-5), "mismatch vs reference"

    print("KERNEL_OK")
</pallas_src>

<mosaic_0001>
module attributes {stable_mosaic.version = 11 : i64} {
  func.func @_fused_linear_kernel(%arg0: i32, %arg1: memref<8x10xf32, #tpu.memory_space<vmem>>, %arg2: memref<10x10xf32, #tpu.memory_space<vmem>>, %arg3: memref<1x10xf32, #tpu.memory_space<vmem>>, %arg4: memref<8x10xf32, #tpu.memory_space<vmem>>) attributes {dimension_semantics = [#tpu.dimension_semantics<parallel>], iteration_bounds = array<i64: 1>, scalar_prefetch = 0 : i64, scratch_operands = 0 : i64, tpu.core_type = #tpu.core_type<tc>, window_params = [{transform_indices = @transform_0, window_bounds = array<i64: 8, 10>}, {pipeline_mode = #tpu.pipeline_mode<synchronous>, transform_indices = @transform_1, window_bounds = array<i64: 10, 10>}, {pipeline_mode = #tpu.pipeline_mode<synchronous>, transform_indices = @transform_2, window_bounds = array<i64: 1, 10>}, {transform_indices = @transform_3, window_bounds = array<i64: 8, 10>}]} {
    %c0 = arith.constant 0 : index
    %c0_0 = arith.constant 0 : index
    %0 = vector.load %arg1[%c0, %c0_0] : memref<8x10xf32, #tpu.memory_space<vmem>>, vector<8x10xf32>
    %c0_1 = arith.constant 0 : index
    %c0_2 = arith.constant 0 : index
    %1 = vector.load %arg2[%c0_1, %c0_2] : memref<10x10xf32, #tpu.memory_space<vmem>>, vector<10x10xf32>
    %cst = arith.constant dense<0.000000e+00> : vector<8x10xf32>
    %2 = tpu.matmul %0, %1, %cst {dimension_numbers = #tpu.dot_dimension_numbers<[1], [0], [0], [1], [0, 0, 1, 1], [], []>} : vector<8x10xf32>, vector<10x10xf32>, vector<8x10xf32> -> vector<8x10xf32>
    %c0_3 = arith.constant 0 : index
    %c0_4 = arith.constant 0 : index
    %3 = vector.load %arg3[%c0_3, %c0_4] : memref<1x10xf32, #tpu.memory_space<vmem>>, vector<1x10xf32>
    %4 = vector.broadcast %3 : vector<1x10xf32> to vector<8x10xf32>
    %5 = arith.addf %2, %4 : vector<8x10xf32>
    %c0_5 = arith.constant 0 : index
    %c0_6 = arith.constant 0 : index
    %6 = vector.load %arg4[%c0_5, %c0_6] : memref<8x10xf32, #tpu.memory_space<vmem>>, vector<8x10xf32>
    tpu.vector_store %arg4[%c0_5, %c0_6], %5 {strides = array<i32>} : memref<8x10xf32, #tpu.memory_space<vmem>>, vector<8x10xf32>,
    return
  }
  func.func @transform_0(%arg0: i32) -> (i32, i32) {
    %c0_i32 = arith.constant 0 : i32
    %c0_i32_0 = arith.constant 0 : i32
    return %arg0, %c0_i32 : i32, i32
  }
  func.func @transform_1(%arg0: i32) -> (i32, i32) {
    %c0_i32 = arith.constant 0 : i32
    %c0_i32_0 = arith.constant 0 : i32
    %c0_i32_1 = arith.constant 0 : i32
    return %c0_i32, %c0_i32_0 : i32, i32
  }
  func.func @transform_2(%arg0: i32) -> (i32, i32) {
    %c0_i32 = arith.constant 0 : i32
    %c0_i32_0 = arith.constant 0 : i32
    %c0_i32_1 = arith.constant 0 : i32
    return %c0_i32, %c0_i32_0 : i32, i32
  }
  func.func @transform_3(%arg0: i32) -> (i32, i32) {
    %c0_i32 = arith.constant 0 : i32
    %c0_i32_0 = arith.constant 0 : i32
    return %arg0, %c0_i32 : i32, i32
  }
}

</mosaic_0001>

<llo_original>
// kernel: tpu_custom_call.1
$region0: #{tpu_custom_call.1}
  #allocation0 [shape = 'u32[]', space=smem, size = 0x4, offset = 0x4, fixed_abs, tag = 'smem constant byte address 0x4 - core index']
  #allocation1 [shape = 'u32[72,128]{1,0:T(1,128)}', space=vmem, size = 0x9000, scoped, tag = 'internal scratch']
  %s0 = inlined_call_operand.hbm [shape: f32[8,10], index: 0, kind: input, shape index: {}]
  %s1 = inlined_call_operand.hbm [shape: f32[10,10], index: 1, kind: input, shape index: {}]
  %s2 = inlined_call_operand.vmem [shape: f32[1,10], index: 2, kind: input, shape index: {}]
  %s3 = inlined_call_operand.hbm [shape: f32[8,10], index: 3, kind: output, shape index: {}]
  %s4 = sld [smem:[#allocation0]]
  $region30: #{tpu_custom_call.1} parent=0
    _
  %s6 = ssub.s32 1, %s4
  %s7 = scalar_select 0, %s6, %s4
  $region1: #{tpu_custom_call.1} parent=0
    #allocation2 [shape = 'u8[4096]{0}', space=vmem, size = 0x1000, scoped, tag = 'input window, operand 0, single buffered']
    #allocation3 [shape = 's32[1]{0}', space=sflag, size = 0x4, scoped, tag = 'scoped memory for tpu_custom_call.1']
    #allocation4 [shape = 's32[1]{0}', space=sflag, size = 0x4, scoped, tag = 'scoped memory for tpu_custom_call.1']
    #allocation5 [shape = 'u8[8192]{0}', space=vmem, size = 0x2000, scoped, tag = 'input window, operand 1, single buffered']
    #allocation6 [shape = 's32[1]{0}', space=sflag, size = 0x4, scoped, tag = 'scoped memory for tpu_custom_call.1']
    #allocation7 [shape = 'u8[4096]{0}', space=vmem, size = 0x1000, scoped, tag = 'output window, operand 0, single buffered']
    %8 = vsyncpa [#allocation3], 0
    %9 = vsyncpa [#allocation6], 0
    %10 = vsyncpa [#allocation4], 0
    // Predicated region
    $region2: #{tpu_custom_call.1} parent=1 // pred_check
      _
    $region3: #{tpu_custom_call.1} parent=1 // pred_check_branch
      %12 = sbr.rel (0) target = $region5
    $region4: #{tpu_custom_call.1} parent=1 // pred_region
      %14 = vsyncadd [#allocation3], 0
      %s16 = sshll.u32 %s0, 4
      %s17 = int_to_ptr.hbm [resolvable:$true] %s16
      %s18 = sshll.u32 [#allocation2], 4
      %s19 = int_to_ptr.vmem [resolvable:$true] %s18
      %21 = dma.hbm_to_vmem [thread:$0]  %s17, 128, %s19, [#allocation3]
    $region5: #{tpu_custom_call.1} parent=1 // pred_fallthru
      _
    // Predicated region
    $region6: #{tpu_custom_call.1} parent=1 // pred_check
      _
    $region7: #{tpu_custom_call.1} parent=1 // pred_check_branch
      %23 = sbr.rel (0) target = $region9
    $region8: #{tpu_custom_call.1} parent=1 // pred_region
      %25 = vsyncadd [#allocation6], 0
      %s26 = sshll.u32 %s1, 4
      %s27 = int_to_ptr.hbm [resolvable:$true] %s26
      %s28 = sshll.u32 [#allocation5], 4
      %s29 = int_to_ptr.vmem [resolvable:$true] %s28
      %34 = dma.hbm_to_vmem [thread:$0]  %s27, 256, %s29, [#allocation6], 128, 128, 8
    $region9: #{tpu_custom_call.1} parent=1 // pred_fallthru
      _
    // Predicated region
    $region10: #{tpu_custom_call.1} parent=1 // pred_check
      _
    $region11: #{tpu_custom_call.1} parent=1 // pred_check_branch
      %36 = sbr.rel (0) target = $region13
    $region12: #{tpu_custom_call.1} parent=1 // pred_region
      _
    $region13: #{tpu_custom_call.1} parent=1 // pred_fallthru
      _
    // Predicated region
    $region14: #{tpu_custom_call.1} parent=1 // pred_check
      _
    $region15: #{tpu_custom_call.1} parent=1 // pred_check_branch
      %38 = sbr.rel (0) target = $region17
    $region16: #{tpu_custom_call.1} parent=1 // pred_region
      %40 = dma.done [#allocation3], 128
    $region17: #{tpu_custom_call.1} parent=1 // pred_fallthru
      _
    // Predicated region
    $region18: #{tpu_custom_call.1} parent=1 // pred_check
      _
    $region19: #{tpu_custom_call.1} parent=1 // pred_check_branch
      %42 = sbr.rel (0) target = $region21
    $region20: #{tpu_custom_call.1} parent=1 // pred_region
      %44 = dma.done [#allocation6], 256
    $region21: #{tpu_custom_call.1} parent=1 // pred_fallthru
      _
    %v45 = vld [vmem:[#allocation2] sm:$0xff]
    %v46 = vld [vmem:[#allocation5] sm:$0xff]
    %v47 = vld [vmem:[#allocation5 + $0x8] sm:$0x3]
    %v48 = vld [vmem:[%s2] sm:$0x1]
    %v50 = vperm.slane %v48, 0
    %vm52 = vcmask 80896
    %v54 = vsel %vm52, %v45, 0
    %vm56 = vcmask 1041408
    %v58 = vsel %vm56, %v47, 0
    %60 = vmatpush.msra.mxu0 0.0
    %61 = vmatpush.msra.mxu0 0.0
    %62 = vmatpush.msra.mxu0 0.0
    %63 = vmatpush.msra.mxu0 0.0
    %64 = vmatpush.msra.mxu0 0.0
    %65 = vmatpush.msra.mxu0 0.0
    %66 = vmatpush.msra.mxu0 0.0
    %67 = vmatpush.msra.mxu0 0.0
    %68 = vmatpush.msra.mxu0 0.0
    %69 = vmatpush.msra.mxu0 0.0
    %70 = vmatpush.msra.mxu0 0.0
    %71 = vmatpush.msra.mxu0 0.0
    %72 = vmatpush.msra.mxu0 0.0
    %73 = vmatpush.msra.mxu0 0.0
    %74 = vmatpush.msra.mxu0 %v58
    %75 = vmatpush.msra.mxu0 %v46
    %76 = vmatmul.f32.gmra.mxu0 %v54
    %v77 = vpop.f32.mrf.mxu0
    %v78 = vadd.f32 %v50, %v77
    %79 = vdwg.mxu0
    %80 = vst.msk [vmem:[#allocation7] sm:$0xff] %vm52, %v78
    // Predicated region
    $region22: #{tpu_custom_call.1} parent=1 // pred_check
      _
    $region23: #{tpu_custom_call.1} parent=1 // pred_check_branch
      %82 = sbr.rel (0) target = $region25
    $region24: #{tpu_custom_call.1} parent=1 // pred_region
      %84 = vsyncadd [#allocation4], 0
      %s86 = sshll.u32 [#allocation7], 4
      %s87 = int_to_ptr.vmem [resolvable:$true] %s86
      %s88 = sshll.u32 %s3, 4
      %s89 = int_to_ptr.hbm [resolvable:$true] %s88
      %91 = dma.vmem_to_hbm [thread:$0]  %s87, 128, %s89, [#allocation4]
    $region25: #{tpu_custom_call.1} parent=1 // pred_fallthru
      _
    // Predicated region
    $region26: #{tpu_custom_call.1} parent=1 // pred_check
      _
    $region27: #{tpu_custom_call.1} parent=1 // pred_check_branch
      %93 = sbr.rel (0) target = $region29
    $region28: #{tpu_custom_call.1} parent=1 // pred_region
      %95 = dma.done [#allocation4], 128
    $region29: #{tpu_custom_call.1} parent=1 // pred_fallthru
      _
    %96 = vsyncpa [#allocation3], 1
    %97 = vsyncpa [#allocation6], 1
    %98 = vsyncpa [#allocation4], 1

</llo_original>
